<compile_context>
chip_gen: v7x
topology: tpu7x:2x2x1
jax: 0.10.0
libtpu: 0.0.40
codegen_flags: <defaults>
</compile_context>

<pallas_src>
import functools
import math

import jax
import jax.numpy as jnp
from jax import lax
from jax.experimental import pallas as pl
from jax.experimental.pallas import tpu as pltpu


def _choose_group(n: int, c: int):
    """Pick a lane-packing factor g (rows folded into the lane axis).

    g must divide n so that [n, c] -> [n // g, g * c] is a pure (copy-free)
    row-major reshape.  Prefer g*c an exact multiple of 128 (perfect lane
    density); otherwise take the divisor of n with the best density.  Returns
    None if no divisor gives at least one full vreg of lanes (caller falls
    back to padding).
    """
    if c >= 128:
        return 1
    g0 = 128 // math.gcd(c, 128)          # smallest g with (g * c) % 128 == 0
    for mult in (1, 2, 4, 8):             # perfect density; prefer more rows
        g = g0 * mult
        if g <= n and n % g == 0:
            return g
    # Otherwise: any divisor of n giving >= 1 full vreg of lanes; pick the
    # best lane density, preferring smaller g (more packed rows for tiling).
    divs = set()
    i = 1
    while i * i <= n:
        if n % i == 0:
            divs.add(i)
            divs.add(n // i)
        i += 1
    best, best_key = None, None
    for g in sorted(divs):
        cp = g * c
        if cp < 128 or cp > 16384:
            continue
        density = cp / (128.0 * (-(-cp // 128)))
        key = (density, -g)
        if best_key is None or key > best_key:
            best, best_key = g, key
    return best


def _bce_with_llr_kernel(x_ref, y_ref, sum_y_ref, s_tar_ref, s_per_ref, *,
                         logit_ptar: float, n_pack: int, bn: int, bpc: int,
                         c_pack: int, acc_rows: int, needs_mask: bool):
    """Accumulate per-lane partial sums: sum(y), sum(y*bce), sum(bce)."""
    p = pl.program_id(0)          # parallel (TensorCore) axis
    i = pl.program_id(1)          # sequential reduction axis

    @pl.when(i == 0)
    def _init():
        sum_y_ref[...] = jnp.zeros_like(sum_y_ref)
        s_tar_ref[...] = jnp.zeros_like(s_tar_ref)
        s_per_ref[...] = jnp.zeros_like(s_per_ref)

    b = p * bpc + i               # nominal global row-block index

    def _fold(v):
        # (bn, c_pack) -> (acc_rows, c_pack) partials.  For acc_rows == 8 this
        # is pure vreg-wise VPU adds (no per-step cross-sublane fold; the 8->1
        # sublane fold happens once in the JAX finalize).
        if acc_rows == 8:
            return v.reshape(bn // 8, 8, c_pack).sum(axis=0)
        return jnp.sum(v, axis=0, keepdims=True)

    def _accumulate(masked):
        x = x_ref[...].astype(jnp.float32)
        y = y_ref[...].astype(jnp.float32)
        xl = x if logit_ptar == 0.0 else x + logit_ptar
        # Numerically stable BCE-with-logits: max(x,0) - x*y + log1p(exp(-|x|)).
        # TODO(synk): if the bundle shows the single EUP pipe saturated on v7x,
        # evaluate the softplus term at bf16 EUP precision after a tolerance check.
        per = jnp.maximum(xl, 0.0) - xl * y + jnp.log1p(jnp.exp(-jnp.abs(xl)))
        if masked:
            # Rows past n_pack (ragged last block / clamped duplicate grid
            # point) hold undefined VMEM data; select (don't multiply) so
            # inf/nan garbage cannot poison the sums.
            row = b * bn + lax.broadcasted_iota(jnp.int32, (bn, 1), 0)
            valid = row < n_pack
            y = jnp.where(valid, y, 0.0)
            per = jnp.where(valid, per, 0.0)
        y_per = y * per
        sum_y_ref[...] += _fold(y)[None]
        s_tar_ref[...] += _fold(y_per)[None]
        s_per_ref[...] += _fold(per)[None]

    if needs_mask:
        num_full = n_pack // bn   # row-blocks guaranteed fully in-bounds

        @pl.when(b < num_full)
        def _full():
            _accumulate(False)

        @pl.when(b >= num_full)
        def _ragged():
            _accumulate(True)
    else:
        _accumulate(False)


def bce_with_llr(x: jax.Array, y: jax.Array, p_tar: float = 0.5, *,
                 block_elems: int = 512 * 1024, num_cores: int = 2) -> jax.Array:
    """Pallas TPU implementation of BCEWithLLR.forward(x, y).

    x, y are [N, C] (or [N]) arrays.  They are streamed in their native dtype
    and cast to f32 inside the kernel, so bf16 logits / bf16 (or int8) labels
    can be fed directly to cut HBM traffic — do not pre-cast in the caller.
    """
    assert 0.0 < p_tar < 1.0, "p_tar must be in (0, 1) (logit would be +-inf)"
    logit_ptar = math.log(p_tar / (1.0 - p_tar))

    if x.ndim == 1:
        x = x[:, None]
        y = y[:, None]
    assert x.ndim == 2 and x.shape == y.shape, "expected matching [N, C] inputs"
    n, c = x.shape
    n_orig = n

    # --- lane packing: [N, C] -> [N/g, g*C] as a *free* row-major reshape ---
    g = _choose_group(n, c)
    if g is None:
        # Rare fallback (no divisor of N gives a full vreg of lanes): pad N up
        # to a multiple of g0.  This is the only path that copies the inputs.
        g = 128 // math.gcd(c, 128)
        n_padded = -(-n // g) * g
        pad = n_padded - n
        if jnp.issubdtype(x.dtype, jnp.floating):
            pad_x = float(jnp.finfo(x.dtype).min) / 2     # dtype-safe sentinel
        else:
            pad_x = int(jnp.iinfo(x.dtype).min) // 2
        # x = very negative, y = 0  =>  exactly zero contribution to all sums.
        x = jnp.pad(x, ((0, pad), (0, 0)), constant_values=pad_x)
        y = jnp.pad(y, ((0, pad), (0, 0)), constant_values=0)
        n = n_padded

    c_pack = g * c
    n_pack = n // g
    xp = x.reshape(n_pack, c_pack)
    yp = y.reshape(n_pack, c_pack)

    # --- row-block size: ~block_elems f32 elements (~2 MiB) per tile, rounded
    # to the native sublane packing of the narrowest input dtype. ---
    sub_mult = 32 // min(jnp.dtype(x.dtype).itemsize, jnp.dtype(y.dtype).itemsize)
    bn = max(sub_mult, (block_elems // c_pack) // sub_mult * sub_mult)
    if bn >= n_pack:
        bn = n_pack                       # single full-dim row block
    num_blocks = -(-n_pack // bn)

    # 2-way "parallel" row split so v7x's two TensorCores each own half the
    # batch reduction (no-op on single-core v5e/v6e).
    num_par = num_cores if num_blocks >= num_cores else 1
    bpc = -(-num_blocks // num_par)       # row-blocks per parallel slice

    acc_rows = 8 if bn % 8 == 0 else 1
    needs_mask = (n_pack % bn != 0) or (num_par * bpc != num_blocks)

    if num_par * bpc == num_blocks:
        def _row_block(p, i):
            return (p * bpc + i, 0)
    else:
        # Clamp the (at most one) excess grid point onto the last real block;
        # its contribution is masked to zero inside the kernel.
        def _row_block(p, i):
            return (jnp.minimum(p * bpc + i, num_blocks - 1), 0)

    def _acc_block(p, i):
        return (p, 0, 0)

    kernel = functools.partial(
        _bce_with_llr_kernel, logit_ptar=logit_ptar, n_pack=n_pack, bn=bn,
        bpc=bpc, c_pack=c_pack, acc_rows=acc_rows, needs_mask=needs_mask)

    acc_shape = jax.ShapeDtypeStruct((num_par, acc_rows, c_pack), jnp.float32)

    sum_y, s_tar, s_per = pl.pallas_call(
        kernel,
        out_shape=(acc_shape, acc_shape, acc_shape),
        grid_spec=pltpu.PrefetchScalarGridSpec(
            num_scalar_prefetch=0,
            grid=(num_par, bpc),
            in_specs=[
                pl.BlockSpec((bn, c_pack), _row_block),
                pl.BlockSpec((bn, c_pack), _row_block),
            ],
            out_specs=(
                pl.BlockSpec((1, acc_rows, c_pack), _acc_block),
                pl.BlockSpec((1, acc_rows, c_pack), _acc_block),
                pl.BlockSpec((1, acc_rows, c_pack), _acc_block),
            ),
        ),
        compiler_params=pltpu.CompilerParams(
            dimension_semantics=("parallel", "arbitrary"),
            vmem_limit_bytes=48 * 1024 * 1024,   # <= v7x's 64 MiB physical VMEM
        ),
    )(xp, yp)

    # --- finalize in plain JAX (tiny [C]-sized arrays) ---
    # Fold per-core / per-sublane partials and the g lane-packed copies of each
    # column, then apply the per-column weights.
    sum_y = sum_y.sum(axis=(0, 1)).reshape(g, c).sum(axis=0)
    s_tar = s_tar.sum(axis=(0, 1)).reshape(g, c).sum(axis=0)
    s_per = s_per.sum(axis=(0, 1)).reshape(g, c).sum(axis=0)
    s_non = s_per - s_tar                 # sum_i (1 - y) * bce

    nf = float(n_orig)
    # NOTE: matches PyTorch semantics exactly; a column with no targets
    # (sum_y == 0) or no non-targets (sum_y == n) yields inf/nan, same as the
    # original module.
    w_tar = (p_tar * nf) / sum_y
    w_non = ((1.0 - p_tar) * nf) / (nf - sum_y)
    loss = (w_tar * s_tar + w_non * s_non).sum() * (1.0 / (nf * c))
    return loss


def _reference(x, y, p_tar=0.5):
    """Pure-JAX reference mirroring the PyTorch module."""
    x = x.astype(jnp.float32)
    y = y.astype(jnp.float32)
    logit_ptar = math.log(p_tar / (1.0 - p_tar))
    ntar = jnp.mean(y, axis=0)
    nnon = jnp.mean(1.0 - y, axis=0)
    weight = y * (p_tar / ntar) + (1.0 - y) * ((1.0 - p_tar) / nnon)
    xl = x + logit_ptar
    per = jnp.maximum(xl, 0.0) - xl * y + jnp.log1p(jnp.exp(-jnp.abs(xl)))
    return jnp.mean(weight * per)


if __name__ == "__main__":
    base_key = jax.random.PRNGKey(0)

    def make(n, c, salt):
        kx, ky = jax.random.split(jax.random.fold_in(base_key, salt))
        xx = jax.random.normal(kx, (n, c), dtype=jnp.float32)             # logits / LLRs
        yy = (jax.random.uniform(ky, (n, c)) < 0.5).astype(jnp.float32)   # binary labels
        # Guarantee every column has >= 1 target and >= 1 non-target
        # (precondition of the module: ntar > 0 and nnon > 0 per column).
        yy = yy.at[0].set(1.0).at[1].set(0.0)
        return xx, yy

    # 1) Small canonical case (free lane packing, single block).
    x, y = make(16, 8, 0)
    loss = jax.block_until_ready(bce_with_llr(x, y, p_tar=0.5))
    ref = _reference(x, y, p_tar=0.5)
    assert jnp.allclose(loss, ref, rtol=1e-5, atol=1e-5), (loss, ref)

    # 2) Multi-block path: 2-way parallel split + ragged (masked) last block.
    x, y = make(6400, 1, 1)
    loss = jax.block_until_ready(bce_with_llr(x, y, p_tar=0.3, block_elems=4096))
    ref = _reference(x, y, p_tar=0.3)
    assert jnp.allclose(loss, ref, rtol=1e-4, atol=1e-4), (loss, ref)

    # 3) Odd block count: clamped duplicate grid point (fully masked) + raggedness.
    x, y = make(9600, 1, 2)
    loss = jax.block_until_ready(bce_with_llr(x, y, p_tar=0.5, block_elems=4096))
    ref = _reference(x, y, p_tar=0.5)
    assert jnp.allclose(loss, ref, rtol=1e-4, atol=1e-4), (loss, ref)

    # 4) Divisor-search lane packing (c_pack not a multiple of 128).
    x, y = make(1000, 3, 3)
    loss = jax.block_until_ready(bce_with_llr(x, y, p_tar=0.5))
    ref = _reference(x, y, p_tar=0.5)
    assert jnp.allclose(loss, ref, rtol=1e-4, atol=1e-4), (loss, ref)

    print("KERNEL_OK")
</pallas_src>

<mosaic_0001>
module attributes {stable_mosaic.version = 11 : i64} {
  func.func @_bce_with_llr_kernel(%arg0: i32, %arg1: i32, %arg2: memref<1x128xf32, #tpu.memory_space<vmem>>, %arg3: memref<1x128xf32, #tpu.memory_space<vmem>>, %arg4: memref<1x1x128xf32, #tpu.memory_space<vmem>>, %arg5: memref<1x1x128xf32, #tpu.memory_space<vmem>>, %arg6: memref<1x1x128xf32, #tpu.memory_space<vmem>>) attributes {dimension_semantics = [#tpu.dimension_semantics<parallel>, #tpu.dimension_semantics<arbitrary>], iteration_bounds = array<i64: 1, 1>, scalar_prefetch = 0 : i64, scratch_operands = 0 : i64, tpu.core_type = #tpu.core_type<tc>, window_params = [{transform_indices = @transform_0, window_bounds = array<i64: 1, 128>}, {transform_indices = @transform_1, window_bounds = array<i64: 1, 128>}, {transform_indices = @transform_2, window_bounds = array<i64: 1, 1, 128>}, {transform_indices = @transform_3, window_bounds = array<i64: 1, 1, 128>}, {transform_indices = @transform_4, window_bounds = array<i64: 1, 1, 128>}]} {
    %c0_i32 = arith.constant 0 : i32
    %0 = arith.cmpi eq, %arg1, %c0_i32 : i32
    %1 = arith.extui %0 : i1 to i32
    %c0_i32_0 = arith.constant 0 : i32
    %2 = arith.cmpi ne, %1, %c0_i32_0 : i32
    scf.if %2 {
      %cst_26 = arith.constant 0.000000e+00 : f32
      %34 = vector.broadcast %cst_26 : f32 to vector<1x1x128xf32>
      %c0_27 = arith.constant 0 : index
      %c0_28 = arith.constant 0 : index
      %c0_29 = arith.constant 0 : index
      %35 = vector.load %arg4[%c0_27, %c0_28, %c0_29] : memref<1x1x128xf32, #tpu.memory_space<vmem>>, vector<1x1x128xf32>
      tpu.vector_store %arg4[%c0_27, %c0_28, %c0_29], %34 {strides = array<i32>} : memref<1x1x128xf32, #tpu.memory_space<vmem>>, vector<1x1x128xf32>,
      %cst_30 = arith.constant 0.000000e+00 : f32
      %36 = vector.broadcast %cst_30 : f32 to vector<1x1x128xf32>
      %c0_31 = arith.constant 0 : index
      %c0_32 = arith.constant 0 : index
      %c0_33 = arith.constant 0 : index
      %37 = vector.load %arg5[%c0_31, %c0_32, %c0_33] : memref<1x1x128xf32, #tpu.memory_space<vmem>>, vector<1x1x128xf32>
      tpu.vector_store %arg5[%c0_31, %c0_32, %c0_33], %36 {strides = array<i32>} : memref<1x1x128xf32, #tpu.memory_space<vmem>>, vector<1x1x128xf32>,
      %cst_34 = arith.constant 0.000000e+00 : f32
      %38 = vector.broadcast %cst_34 : f32 to vector<1x1x128xf32>
      %c0_35 = arith.constant 0 : index
      %c0_36 = arith.constant 0 : index
      %c0_37 = arith.constant 0 : index
      %39 = vector.load %arg6[%c0_35, %c0_36, %c0_37] : memref<1x1x128xf32, #tpu.memory_space<vmem>>, vector<1x1x128xf32>
      tpu.vector_store %arg6[%c0_35, %c0_36, %c0_37], %38 {strides = array<i32>} : memref<1x1x128xf32, #tpu.memory_space<vmem>>, vector<1x1x128xf32>,
    } else {
    }
    %c0 = arith.constant 0 : index
    %c0_1 = arith.constant 0 : index
    %3 = vector.load %arg2[%c0, %c0_1] : memref<1x128xf32, #tpu.memory_space<vmem>>, vector<1x128xf32>
    %c0_2 = arith.constant 0 : index
    %c0_3 = arith.constant 0 : index
    %4 = vector.load %arg3[%c0_2, %c0_3] : memref<1x128xf32, #tpu.memory_space<vmem>>, vector<1x128xf32>
    %cst = arith.constant 0.000000e+00 : f32
    %5 = vector.broadcast %cst : f32 to vector<1x128xf32>
    %6 = arith.maximumf %3, %5 : vector<1x128xf32>
    %7 = arith.mulf %3, %4 : vector<1x128xf32>
    %8 = arith.subf %6, %7 : vector<1x128xf32>
    %9 = math.absf %3 : vector<1x128xf32>
    %cst_4 = arith.constant 0.000000e+00 : f32
    %10 = vector.broadcast %cst_4 : f32 to vector<1x128xf32>
    %11 = arith.subf %10, %9 : vector<1x128xf32>
    %12 = math.exp %11 : vector<1x128xf32>
    %13 = math.log1p %12 : vector<1x128xf32>
    %14 = arith.addf %8, %13 : vector<1x128xf32>
    %15 = arith.mulf %4, %14 : vector<1x128xf32>
    %c0_5 = arith.constant 0 : index
    %c0_6 = arith.constant 0 : index
    %c0_7 = arith.constant 0 : index
    %16 = vector.load %arg4[%c0_5, %c0_6, %c0_7] : memref<1x1x128xf32, #tpu.memory_space<vmem>>, vector<1x1x128xf32>
    %cst_8 = arith.constant dense<0.000000e+00> : vector<128xf32>
    %17 = vector.multi_reduction <add>, %4, %cst_8 [0] : vector<1x128xf32> to vector<128xf32>
    %18 = vector.shape_cast %17 : vector<128xf32> to vector<1x128xf32>
    %19 = vector.shape_cast %18 : vector<1x128xf32> to vector<1x1x128xf32>
    %20 = arith.addf %16, %19 : vector<1x1x128xf32>
    %c0_9 = arith.constant 0 : index
    %c0_10 = arith.constant 0 : index
    %c0_11 = arith.constant 0 : index
    %21 = vector.load %arg4[%c0_9, %c0_10, %c0_11] : memref<1x1x128xf32, #tpu.memory_space<vmem>>, vector<1x1x128xf32>
    tpu.vector_store %arg4[%c0_9, %c0_10, %c0_11], %20 {strides = array<i32>} : memref<1x1x128xf32, #tpu.memory_space<vmem>>, vector<1x1x128xf32>,
    %c0_12 = arith.constant 0 : index
    %c0_13 = arith.constant 0 : index
    %c0_14 = arith.constant 0 : index
    %22 = vector.load %arg5[%c0_12, %c0_13, %c0_14] : memref<1x1x128xf32, #tpu.memory_space<vmem>>, vector<1x1x128xf32>
    %cst_15 = arith.constant dense<0.000000e+00> : vector<128xf32>
    %23 = vector.multi_reduction <add>, %15, %cst_15 [0] : vector<1x128xf32> to vector<128xf32>
    %24 = vector.shape_cast %23 : vector<128xf32> to vector<1x128xf32>
    %25 = vector.shape_cast %24 : vector<1x128xf32> to vector<1x1x128xf32>
    %26 = arith.addf %22, %25 : vector<1x1x128xf32>
    %c0_16 = arith.constant 0 : index
    %c0_17 = arith.constant 0 : index
    %c0_18 = arith.constant 0 : index
    %27 = vector.load %arg5[%c0_16, %c0_17, %c0_18] : memref<1x1x128xf32, #tpu.memory_space<vmem>>, vector<1x1x128xf32>
    tpu.vector_store %arg5[%c0_16, %c0_17, %c0_18], %26 {strides = array<i32>} : memref<1x1x128xf32, #tpu.memory_space<vmem>>, vector<1x1x128xf32>,
    %c0_19 = arith.constant 0 : index
    %c0_20 = arith.constant 0 : index
    %c0_21 = arith.constant 0 : index
    %28 = vector.load %arg6[%c0_19, %c0_20, %c0_21] : memref<1x1x128xf32, #tpu.memory_space<vmem>>, vector<1x1x128xf32>
    %cst_22 = arith.constant dense<0.000000e+00> : vector<128xf32>
    %29 = vector.multi_reduction <add>, %14, %cst_22 [0] : vector<1x128xf32> to vector<128xf32>
    %30 = vector.shape_cast %29 : vector<128xf32> to vector<1x128xf32>
    %31 = vector.shape_cast %30 : vector<1x128xf32> to vector<1x1x128xf32>
    %32 = arith.addf %28, %31 : vector<1x1x128xf32>
    %c0_23 = arith.constant 0 : index
    %c0_24 = arith.constant 0 : index
    %c0_25 = arith.constant 0 : index
    %33 = vector.load %arg6[%c0_23, %c0_24, %c0_25] : memref<1x1x128xf32, #tpu.memory_space<vmem>>, vector<1x1x128xf32>
    tpu.vector_store %arg6[%c0_23, %c0_24, %c0_25], %32 {strides = array<i32>} : memref<1x1x128xf32, #tpu.memory_space<vmem>>, vector<1x1x128xf32>,
    return
  }
  func.func @transform_0(%arg0: i32, %arg1: i32) -> (i32, i32) {
    %c1_i32 = arith.constant 1 : i32
    %0 = arith.muli %arg0, %c1_i32 : i32
    %1 = arith.addi %0, %arg1 : i32
    %c0_i32 = arith.constant 0 : i32
    %c0_i32_0 = arith.constant 0 : i32
    return %1, %c0_i32 : i32, i32
  }
  func.func @transform_1(%arg0: i32, %arg1: i32) -> (i32, i32) {
    %c1_i32 = arith.constant 1 : i32
    %0 = arith.muli %arg0, %c1_i32 : i32
    %1 = arith.addi %0, %arg1 : i32
    %c0_i32 = arith.constant 0 : i32
    %c0_i32_0 = arith.constant 0 : i32
    return %1, %c0_i32 : i32, i32
  }
  func.func @transform_2(%arg0: i32, %arg1: i32) -> (i32, i32, i32) {
    %c0_i32 = arith.constant 0 : i32
    %c0_i32_0 = arith.constant 0 : i32
    %c0_i32_1 = arith.constant 0 : i32
    return %arg0, %c0_i32, %c0_i32_0 : i32, i32, i32
  }
  func.func @transform_3(%arg0: i32, %arg1: i32) -> (i32, i32, i32) {
    %c0_i32 = arith.constant 0 : i32
    %c0_i32_0 = arith.constant 0 : i32
    %c0_i32_1 = arith.constant 0 : i32
    return %arg0, %c0_i32, %c0_i32_0 : i32, i32, i32
  }
  func.func @transform_4(%arg0: i32, %arg1: i32) -> (i32, i32, i32) {
    %c0_i32 = arith.constant 0 : i32
    %c0_i32_0 = arith.constant 0 : i32
    %c0_i32_1 = arith.constant 0 : i32
    return %arg0, %c0_i32, %c0_i32_0 : i32, i32, i32
  }
}

</mosaic_0001>

<llo_original>
// kernel: tpu_custom_call.1
$region0: #{tpu_custom_call.1}
  #allocation0 [shape = 'u32[]', space=smem, size = 0x4, offset = 0x4, fixed_abs, tag = 'smem constant byte address 0x4 - core index']
  #allocation1 [shape = 'u32[144,128]{1,0:T(1,128)}', space=vmem, size = 0x12000, scoped, tag = 'internal scratch']
  %s0 = inlined_call_operand.hbm [shape: f32[1,128], index: 0, kind: input, shape index: {}]
  %s1 = inlined_call_operand.vmem [shape: f32[1,128], index: 1, kind: input, shape index: {}]
  %s2 = inlined_call_operand.hbm [shape: f32[1,1,128], index: 2, kind: output, shape index: {0}]
  %s3 = inlined_call_operand.hbm [shape: f32[1,1,128], index: 3, kind: output, shape index: {1}]
  %s4 = inlined_call_operand.hbm [shape: f32[1,1,128], index: 4, kind: output, shape index: {2}]
  %5 = xla_tuple %s2, %s3, %s4
  %s6 = sld [smem:[#allocation0]]
  $region42: #{tpu_custom_call.1} parent=0
    _
  %s8 = ssub.s32 1, %s6
  %s9 = scalar_select 0, %s8, %s6
  $region1: #{tpu_custom_call.1} parent=0
    #allocation2 [shape = 'u8[512]{0}', space=vmem, size = 0x400, scoped, tag = 'input window, operand 0, single buffered']
    #allocation3 [shape = 's32[1]{0}', space=sflag, size = 0x4, scoped, tag = 'scoped memory for tpu_custom_call.1']
    #allocation4 [shape = 's32[1]{0}', space=sflag, size = 0x4, scoped, tag = 'scoped memory for tpu_custom_call.1']
    #allocation5 [shape = 'u8[512]{0}', space=vmem, size = 0x400, scoped, tag = 'output window, operand 0, single buffered']
    #allocation6 [shape = 'u8[512]{0}', space=vmem, size = 0x400, scoped, tag = 'output window, operand 1, single buffered']
    #allocation7 [shape = 's32[1]{0}', space=sflag, size = 0x4, scoped, tag = 'scoped memory for tpu_custom_call.1']
    #allocation8 [shape = 'u8[512]{0}', space=vmem, size = 0x400, scoped, tag = 'output window, operand 2, single buffered']
    %10 = vsyncpa [#allocation3], 0
    %11 = vsyncpa [#allocation4], 0
    %12 = vsyncpa [#allocation7], 0
    // Predicated region
    $region2: #{tpu_custom_call.1} parent=1 // pred_check
      _
    $region3: #{tpu_custom_call.1} parent=1 // pred_check_branch
      %14 = sbr.rel (0) target = $region5
    $region4: #{tpu_custom_call.1} parent=1 // pred_region
      %s15 = sadd.s32 0, 0
      %s17 = ssub.s32 16, 16
      %18 = vsyncadd [#allocation3], %s17
      %s19 = smul.addr %s15, 16
      %s20 = scalar_lea.hbm %s0, %s19
      %s22 = sshll.u32 [#allocation2], 4
      %s23 = int_to_ptr.vmem [resolvable:$true] %s22
      %25 = dma.hbm_to_vmem [thread:$0]  %s20, 16, %s23, [#allocation3]
    $region5: #{tpu_custom_call.1} parent=1 // pred_fallthru
      _
    // Predicated region
    $region6: #{tpu_custom_call.1} parent=1 // pred_check
      _
    $region7: #{tpu_custom_call.1} parent=1 // pred_check_branch
      %27 = sbr.rel (0) target = $region9
    $region8: #{tpu_custom_call.1} parent=1 // pred_region
      %s28 = sadd.s32 0, 0
      %p29 = scmp.lt.s32.totalorder %s28, 0
      %s30 = scalar_select %p29, %s28, 0
      %s31 = scalar_lea.vmem %s1, %s30
      %s32 = sadd.s32 0, 0
    $region9: #{tpu_custom_call.1} parent=1 // pred_fallthru
      _
    // Predicated region
    $region10: #{tpu_custom_call.1} parent=1 // pred_check
      _
    $region11: #{tpu_custom_call.1} parent=1 // pred_check_branch
      %34 = sbr.rel (0) target = $region13
    $region12: #{tpu_custom_call.1} parent=1 // pred_region
      %35 = dma.done [#allocation3], 16
    $region13: #{tpu_custom_call.1} parent=1 // pred_fallthru
      _
    %s36 = sadd.s32 0, 0
    %p37 = scmp.lt.s32.totalorder %s36, 0
    %s38 = scalar_select %p37, %s36, 0
    %s39 = scalar_lea.vmem %s1, %s38
    %s40 = sadd.s32 0, 0
    %s41 = sadd.s32 0, 0
    %p42 = scmp.lt.s32.totalorder %s41, 0
    %s43 = scalar_select %p42, %s41, 0
    %s44 = scalar_lea.vmem %s1, %s43
    %s45 = sadd.s32 0, 0
    %p46 = scmp.eq.s32.totalorder 0, 0
    // Predicated region
    $region14: #{tpu_custom_call.1} parent=1 // pred_check
      %p47 = pneg %p46
    $region15: #{tpu_custom_call.1} parent=1 // pred_check_branch
      %49 = sbr.rel (%p47) target = $region17
    $region16: #{tpu_custom_call.1} parent=1 // pred_region
      %50 = vst [vmem:[#allocation5] sm:$0x1] 0.0
      %51 = vst [vmem:[#allocation6] sm:$0x1] 0.0
      %52 = vst [vmem:[#allocation8] sm:$0x1] 0.0
    $region17: #{tpu_custom_call.1} parent=1 // pred_fallthru
      _
    %v53 = vld [vmem:[#allocation2] sm:$0x1]
    %v54 = vld [vmem:[%s44] sm:$0x1]
    %v55 = vmax.f32 %v53, 0.0
    %v56 = vmul.f32 %v53, %v54
    %v57 = vsub.f32 %v55, %v56
    %v58 = vand.u32 2147483647, %v53
    %v59 = vsub.f32 0.0, %v58
    %v60 = vmul.f32 %v59, 1.442695
    %v61 = vpow.pop %v60
    %v62 = vadd.f32 %v61, 1.0
    %v63 = vlog2.pop %v62
    %v64 = vmul.f32 %v63, 0.6931472
    %v65 = vmul.f32 -0.5, %v61
    %v66 = vadd.f32 %v65, 1.0
    %v67 = vmul.f32 %v66, %v61
    %v68 = vand.u32 2147483647, %v61
    %vm69 = vcmp.lt.f32.partialorder %v68, 0.0004427343
    %v70 = vsel %vm69, %v67, %v64
    %v71 = vadd.f32 %v57, %v70
    %v72 = vmul.f32 %v54, %v71
    %v73 = vld [vmem:[#allocation5] sm:$0x1]
    %v74 = vadd.f32 %v54, 0.0
    %v75 = vadd.f32 %v73, %v74
    %76 = vst [vmem:[#allocation5] sm:$0x1] %v75
    %v77 = vld [vmem:[#allocation6] sm:$0x1]
    %v78 = vadd.f32 %v72, 0.0
    %v79 = vadd.f32 %v77, %v78
    %80 = vst [vmem:[#allocation6] sm:$0x1] %v79
    %v81 = vld [vmem:[#allocation8] sm:$0x1]
    %v82 = vadd.f32 %v71, 0.0
    %v83 = vadd.f32 %v81, %v82
    %84 = vst [vmem:[#allocation8] sm:$0x1] %v83
    // Predicated region
    $region18: #{tpu_custom_call.1} parent=1 // pred_check
      _
    $region19: #{tpu_custom_call.1} parent=1 // pred_check_branch
      %86 = sbr.rel (0) target = $region21
    $region20: #{tpu_custom_call.1} parent=1 // pred_region
      %s88 = ssub.s32 16, 16
      %89 = vsyncadd [#allocation4], %s88
      %s91 = sshll.u32 [#allocation5], 4
      %s92 = int_to_ptr.vmem [resolvable:$true] %s91
      %94 = dma.vmem_to_hbm [thread:$0]  %s92, 16, %s2, [#allocation4]
    $region21: #{tpu_custom_call.1} parent=1 // pred_fallthru
      _
    // Predicated region
    $region22: #{tpu_custom_call.1} parent=1 // pred_check
      _
    $region23: #{tpu_custom_call.1} parent=1 // pred_check_branch
      %96 = sbr.rel (0) target = $region25
    $region24: #{tpu_custom_call.1} parent=1 // pred_region
      %s98 = ssub.s32 16, 16
      %99 = vsyncadd [#allocation7], %s98
      %s101 = sshll.u32 [#allocation6], 4
      %s102 = int_to_ptr.vmem [resolvable:$true] %s101
      %104 = dma.vmem_to_hbm [thread:$0]  %s102, 16, %s3, [#allocation7]
    $region25: #{tpu_custom_call.1} parent=1 // pred_fallthru
      _
    // Predicated region
    $region26: #{tpu_custom_call.1} parent=1 // pred_check
      _
    $region27: #{tpu_custom_call.1} parent=1 // pred_check_branch
      %106 = sbr.rel (0) target = $region29
    $region28: #{tpu_custom_call.1} parent=1 // pred_region
      %s108 = ssub.s32 16, 16
      %109 = vsyncadd [#allocation7], %s108
      %s111 = sshll.u32 [#allocation8], 4
      %s112 = int_to_ptr.vmem [resolvable:$true] %s111
      %114 = dma.vmem_to_hbm [thread:$0]  %s112, 16, %s4, [#allocation7]
    $region29: #{tpu_custom_call.1} parent=1 // pred_fallthru
      _
    // Predicated region
    $region30: #{tpu_custom_call.1} parent=1 // pred_check
      _
    $region31: #{tpu_custom_call.1} parent=1 // pred_check_branch
      %116 = sbr.rel (0) target = $region33
    $region32: #{tpu_custom_call.1} parent=1 // pred_region
      %117 = dma.done [#allocation4], 16
    $region33: #{tpu_custom_call.1} parent=1 // pred_fallthru
      _
    // Predicated region
    $region34: #{tpu_custom_call.1} parent=1 // pred_check
      _
    $region35: #{tpu_custom_call.1} parent=1 // pred_check_branch
      %119 = sbr.rel (0) target = $region37
    $region36: #{tpu_custom_call.1} parent=1 // pred_region
      %120 = dma.done [#allocation7], 16
    $region37: #{tpu_custom_call.1} parent=1 // pred_fallthru
      _
    // Predicated region
    $region38: #{tpu_custom_call.1} parent=1 // pred_check
      _
    $region39: #{tpu_custom_call.1} parent=1 // pred_check_branch
      %122 = sbr.rel (0) target = $region41
    $region40: #{tpu_custom_call.1} parent=1 // pred_region
      %123 = dma.done [#allocation7], 16
    $region41: #{tpu_custom_call.1} parent=1 // pred_fallthru
      _
    %124 = vsyncpa [#allocation3], 1
    %125 = vsyncpa [#allocation4], 1
    %126 = vsyncpa [#allocation7], 1

</llo_original>
